<compile_context>
chip_gen: v7x
topology: tpu7x:2x2x1
jax: 0.10.0
libtpu: 0.0.40
codegen_flags: <defaults>
</compile_context>

<pallas_src>
import functools

import jax
import jax.numpy as jnp
from jax.experimental import pallas as pl
from jax.experimental.pallas import tpu as pltpu


def _smooth_ce_tile_kernel(x_ref, t_ref, out_ref, *, alpha, num_classes,
                           batch_size, tile_b):
    """Per-batch-tile partial loss for label-smoothed cross entropy.

    x_ref  : (TB, C_pad) logits tile (padded class lanes hold zeros; masked here)
    t_ref  : (TB, 1) int32 targets tile (padded rows hold 0; masked here)
    out_ref: (1, 8, 128) f32 lane-dense block holding this tile's partial sum
    """
    x = x_ref[...].astype(jnp.float32)                         # (TB, Cp)
    t = t_ref[...]                                             # (TB, 1) int32
    tb, cp = x.shape

    cls = jax.lax.broadcasted_iota(jnp.int32, (tb, cp), 1)
    class_valid = cls < num_classes                            # (TB, Cp) bool

    # Numerically stable log-softmax pieces, masking padded class lanes.
    x_masked = jnp.where(class_valid, x, jnp.float32(-1e30))
    m = jnp.max(x_masked, axis=-1, keepdims=True)              # (TB, 1)
    shifted = x - m                                            # (TB, Cp)
    exp_s = jnp.where(class_valid, jnp.exp(shifted), 0.0)
    lse = jnp.log(jnp.sum(exp_s, axis=-1, keepdims=True))      # (TB, 1)

    # Algebraic form of  -sum_c y_smooth[c] * log_softmax[c]  (no one-hot):
    #   loss_row = lse - (1-alpha)*shifted[target] - (alpha/C)*sum_c shifted[c]
    sum_shifted = jnp.sum(jnp.where(class_valid, shifted, 0.0),
                          axis=-1, keepdims=True)              # (TB, 1)
    shifted_t = jnp.sum(jnp.where(cls == t, shifted, 0.0),
                        axis=-1, keepdims=True)                # (TB, 1)
    loss_rows = (lse
                 - (1.0 - alpha) * shifted_t
                 - (alpha / num_classes) * sum_shifted)        # (TB, 1)

    # Mask batch-padding rows (per-row then per-tile partial sums).
    row_idx = (pl.program_id(0) * tile_b
               + jax.lax.broadcasted_iota(jnp.int32, (tb, 1), 0))
    row_valid = (row_idx < batch_size).astype(jnp.float32)
    partial = jnp.sum(loss_rows * row_valid)                   # scalar f32

    # Lane-dense, unmasked store of the tile's partial (distinct block per tile).
    out_ref[...] = jnp.zeros((1, 8, 128), jnp.float32) + partial


def smooth_ce_loss(outputs, targets, alpha=1e-06, reduction="mean"):
    """Pallas implementation of smoothCELoss.forward.

    outputs: (B, C) float logits
    targets: (B,)   int class indices
    Returns (loss_scalar_array, {'T': loss_scalar_array}).
    """
    B, C = outputs.shape

    # ---- tiling: (8,128)-aligned, sized against a ~12 MiB double-buffer budget
    c_pad = pl.cdiv(C, 128) * 128
    tile_budget = 12 * 1024 * 1024                 # bytes for 2x logits tile
    tb = max(8, (tile_budget // (2 * c_pad * 4)) // 8 * 8)
    tb = min(512, tb, pl.cdiv(B, 8) * 8)
    b_pad = pl.cdiv(B, tb) * tb
    n_tiles = b_pad // tb

    x = outputs
    if (b_pad, c_pad) != (B, C):
        x = jnp.pad(x, ((0, b_pad - B), (0, c_pad - C)))
    t2d = targets.astype(jnp.int32).reshape(B, 1)
    if b_pad != B:
        t2d = jnp.pad(t2d, ((0, b_pad - B), (0, 0)))

    kernel = functools.partial(
        _smooth_ce_tile_kernel,
        alpha=float(alpha), num_classes=C, batch_size=B, tile_b=tb,
    )

    partials = pl.pallas_call(
        kernel,
        out_shape=jax.ShapeDtypeStruct((n_tiles, 8, 128), jnp.float32),
        grid=(n_tiles,),
        in_specs=[
            pl.BlockSpec((tb, c_pad), lambda i: (i, 0)),   # logits tile
            pl.BlockSpec((tb, 1), lambda i: (i, 0)),       # targets tile
        ],
        out_specs=pl.BlockSpec((1, 8, 128), lambda i: (i, 0, 0)),
        compiler_params=pltpu.CompilerParams(
            dimension_semantics=("parallel",),
            vmem_limit_bytes=32 * 1024 * 1024,
        ),
        cost_estimate=pl.CostEstimate(
            flops=int(5 * B * C),
            transcendentals=int(B * C),
            bytes_accessed=int(4 * b_pad * c_pad + 4 * b_pad + 4 * n_tiles * 8 * 128),
        ),
    )(x, t2d)

    # Tiny finalize in plain JAX: sum per-tile partials once, divide by B once.
    loss = jnp.sum(partials[:, 0, 0])
    if reduction == "mean":
        loss = loss / B
    # TODO(synk): torch returns loss.cpu().item() in the dict; keep the device
    # scalar to avoid a host sync in the hot path (caller can .item() lazily).
    return loss, {"T": loss}


def _reference(outputs, targets, alpha=1e-06, reduction="mean"):
    B, C = outputs.shape
    y_hot = jax.nn.one_hot(targets, C, dtype=jnp.float32)
    y_smooth = (1.0 - alpha) * y_hot + alpha / C
    logp = jax.nn.log_softmax(outputs.astype(jnp.float32), axis=-1)
    loss = jnp.sum(-y_smooth * logp)
    if reduction == "mean":
        loss = loss / B
    return loss


if __name__ == "__main__":
    key = jax.random.PRNGKey(0)
    k1, k2 = jax.random.split(key)

    B, C = 8, 32  # small shapes consistent with (batch, num_classes) inputs
    outputs = jax.random.normal(k1, (B, C), dtype=jnp.float32)
    targets = jax.random.randint(k2, (B,), 0, C, dtype=jnp.int32)

    loss, info = smooth_ce_loss(outputs, targets, alpha=1e-06, reduction="mean")
    loss = jax.block_until_ready(loss)

    ref = jax.block_until_ready(_reference(outputs, targets, alpha=1e-06,
                                           reduction="mean"))
    assert jnp.allclose(loss, ref, rtol=1e-5, atol=1e-5), (loss, ref)

    print("KERNEL_OK")
</pallas_src>

<mosaic_0001>
module attributes {stable_mosaic.version = 11 : i64} {
  func.func @_smooth_ce_tile_kernel(%arg0: i32, %arg1: memref<8x128xf32, #tpu.memory_space<vmem>>, %arg2: memref<8x1xi32, #tpu.memory_space<vmem>>, %arg3: memref<1x8x128xf32, #tpu.memory_space<vmem>>) attributes {dimension_semantics = [#tpu.dimension_semantics<parallel>], iteration_bounds = array<i64: 1>, scalar_prefetch = 0 : i64, scratch_operands = 0 : i64, tpu.core_type = #tpu.core_type<tc>, window_params = [{transform_indices = @transform_0, window_bounds = array<i64: 8, 128>}, {transform_indices = @transform_1, window_bounds = array<i64: 8, 1>}, {transform_indices = @transform_2, window_bounds = array<i64: 1, 8, 128>}]} {
    %c0 = arith.constant 0 : index
    %c0_0 = arith.constant 0 : index
    %0 = vector.load %arg1[%c0, %c0_0] : memref<8x128xf32, #tpu.memory_space<vmem>>, vector<8x128xf32>
    %c0_1 = arith.constant 0 : index
    %c0_2 = arith.constant 0 : index
    %1 = vector.load %arg2[%c0_1, %c0_2] : memref<8x1xi32, #tpu.memory_space<vmem>>, vector<8x1xi32>
    %2 = tpu.iota {dimensions = array<i32: 1>} : vector<8x128xi32>
    %c32_i32 = arith.constant 32 : i32
    %3 = vector.broadcast %c32_i32 : i32 to vector<8x128xi32>
    %4 = arith.cmpi slt, %2, %3 : vector<8x128xi32>
    %cst = arith.constant -1.000000e+30 : f32
    %5 = vector.broadcast %cst : f32 to vector<8x128xf32>
    %6 = arith.select %4, %0, %5 : vector<8x128xi1>, vector<8x128xf32>
    %cst_3 = arith.constant dense<0xFF800000> : vector<8xf32>
    %7 = vector.multi_reduction <maximumf>, %6, %cst_3 [1] : vector<8x128xf32> to vector<8xf32>
    %8 = vector.shape_cast %7 : vector<8xf32> to vector<8x1xf32>
    %9 = vector.broadcast %8 : vector<8x1xf32> to vector<8x128xf32>
    %10 = arith.subf %0, %9 : vector<8x128xf32>
    %11 = math.exp %10 : vector<8x128xf32>
    %cst_4 = arith.constant 0.000000e+00 : f32
    %12 = vector.broadcast %cst_4 : f32 to vector<8x128xf32>
    %13 = arith.select %4, %11, %12 : vector<8x128xi1>, vector<8x128xf32>
    %cst_5 = arith.constant dense<0.000000e+00> : vector<8xf32>
    %14 = vector.multi_reduction <add>, %13, %cst_5 [1] : vector<8x128xf32> to vector<8xf32>
    %15 = vector.shape_cast %14 : vector<8xf32> to vector<8x1xf32>
    %16 = math.log %15 : vector<8x1xf32>
    %cst_6 = arith.constant 0.000000e+00 : f32
    %17 = vector.broadcast %cst_6 : f32 to vector<8x128xf32>
    %18 = arith.select %4, %10, %17 : vector<8x128xi1>, vector<8x128xf32>
    %cst_7 = arith.constant dense<0.000000e+00> : vector<8xf32>
    %19 = vector.multi_reduction <add>, %18, %cst_7 [1] : vector<8x128xf32> to vector<8xf32>
    %20 = vector.shape_cast %19 : vector<8xf32> to vector<8x1xf32>
    %21 = vector.broadcast %1 : vector<8x1xi32> to vector<8x128xi32>
    %22 = arith.cmpi eq, %2, %21 : vector<8x128xi32>
    %cst_8 = arith.constant 0.000000e+00 : f32
    %23 = vector.broadcast %cst_8 : f32 to vector<8x128xf32>
    %24 = arith.select %22, %10, %23 : vector<8x128xi1>, vector<8x128xf32>
    %cst_9 = arith.constant dense<0.000000e+00> : vector<8xf32>
    %25 = vector.multi_reduction <add>, %24, %cst_9 [1] : vector<8x128xf32> to vector<8xf32>
    %26 = vector.shape_cast %25 : vector<8xf32> to vector<8x1xf32>
    %cst_10 = arith.constant 0.999998986 : f32
    %27 = vector.broadcast %cst_10 : f32 to vector<8x1xf32>
    %28 = arith.mulf %27, %26 : vector<8x1xf32>
    %29 = arith.subf %16, %28 : vector<8x1xf32>
    %cst_11 = arith.constant 3.125000e-08 : f32
    %30 = vector.broadcast %cst_11 : f32 to vector<8x1xf32>
    %31 = arith.mulf %30, %20 : vector<8x1xf32>
    %32 = arith.subf %29, %31 : vector<8x1xf32>
    %c8_i32 = arith.constant 8 : i32
    %33 = arith.muli %arg0, %c8_i32 : i32
    %34 = tpu.iota {dimensions = array<i32: 0>} : vector<8x1xi32>
    %35 = vector.broadcast %33 : i32 to vector<8x1xi32>
    %36 = arith.addi %35, %34 : vector<8x1xi32>
    %c8_i32_12 = arith.constant 8 : i32
    %37 = vector.broadcast %c8_i32_12 : i32 to vector<8x1xi32>
    %38 = arith.cmpi slt, %36, %37 : vector<8x1xi32>
    %39 = arith.extui %38 : vector<8x1xi1> to vector<8x1xi32>
    %40 = arith.sitofp %39 : vector<8x1xi32> to vector<8x1xf32>
    %41 = arith.mulf %32, %40 : vector<8x1xf32>
    %42 = vector.shape_cast %41 : vector<8x1xf32> to vector<1x8x1xf32>
    %cst_13 = arith.constant dense<0.000000e+00> : vector<1xf32>
    %43 = vector.multi_reduction <add>, %42, %cst_13 [1, 2] : vector<1x8x1xf32> to vector<1xf32>
    %44 = vector.shape_cast %43 : vector<1xf32> to vector<1x1x1xf32>
    %45 = vector.extract %44[0, 0, 0] : f32 from vector<1x1x1xf32>
    %cst_14 = arith.constant 0.000000e+00 : f32
    %46 = vector.broadcast %cst_14 : f32 to vector<1x8x128xf32>
    %47 = vector.broadcast %45 : f32 to vector<1x8x128xf32>
    %48 = arith.addf %46, %47 : vector<1x8x128xf32>
    %c0_15 = arith.constant 0 : index
    %c0_16 = arith.constant 0 : index
    %c0_17 = arith.constant 0 : index
    %49 = vector.load %arg3[%c0_15, %c0_16, %c0_17] : memref<1x8x128xf32, #tpu.memory_space<vmem>>, vector<1x8x128xf32>
    tpu.vector_store %arg3[%c0_15, %c0_16, %c0_17], %48 {strides = array<i32>} : memref<1x8x128xf32, #tpu.memory_space<vmem>>, vector<1x8x128xf32>,
    return
  }
  func.func @transform_0(%arg0: i32) -> (i32, i32) {
    %c0_i32 = arith.constant 0 : i32
    %c0_i32_0 = arith.constant 0 : i32
    return %arg0, %c0_i32 : i32, i32
  }
  func.func @transform_1(%arg0: i32) -> (i32, i32) {
    %c0_i32 = arith.constant 0 : i32
    %c0_i32_0 = arith.constant 0 : i32
    return %arg0, %c0_i32 : i32, i32
  }
  func.func @transform_2(%arg0: i32) -> (i32, i32, i32) {
    %c0_i32 = arith.constant 0 : i32
    %c0_i32_0 = arith.constant 0 : i32
    %c0_i32_1 = arith.constant 0 : i32
    return %arg0, %c0_i32, %c0_i32_0 : i32, i32, i32
  }
}

</mosaic_0001>

<llo_original>
// kernel: tpu_custom_call.1
$region0: #{tpu_custom_call.1}
  #allocation0 [shape = 'u32[]', space=smem, size = 0x4, offset = 0x4, fixed_abs, tag = 'smem constant byte address 0x4 - core index']
  #allocation1 [shape = 'u32[144,128]{1,0:T(1,128)}', space=vmem, size = 0x12000, scoped, tag = 'internal scratch']
  %s0 = inlined_call_operand.vmem [shape: f32[8,128], index: 0, kind: input, shape index: {}]
  %s1 = inlined_call_operand.vmem [shape: s32[8,1], index: 1, kind: input, shape index: {}]
  %s2 = inlined_call_operand.hbm [shape: f32[1,8,128], index: 2, kind: output, shape index: {}]
  %s3 = sld [smem:[#allocation0]]
  $region18: #{tpu_custom_call.1} parent=0
    _
  %s5 = ssub.s32 1, %s3
  %s6 = scalar_select 0, %s5, %s3
  $region1: #{tpu_custom_call.1} parent=0
    #allocation2 [shape = 'u8[4096]{0}', space=vmem, size = 0x1000, scoped, tag = 'output window, operand 0, single buffered']
    #allocation3 [shape = 's32[1]{0}', space=sflag, size = 0x4, scoped, tag = 'scoped memory for tpu_custom_call.1']
    %7 = vsyncpa [#allocation3], 0
    // Predicated region
    $region2: #{tpu_custom_call.1} parent=1 // pred_check
      _
    $region3: #{tpu_custom_call.1} parent=1 // pred_check_branch
      %9 = sbr.rel (0) target = $region5
    $region4: #{tpu_custom_call.1} parent=1 // pred_region
      _
    $region5: #{tpu_custom_call.1} parent=1 // pred_fallthru
      _
    // Predicated region
    $region6: #{tpu_custom_call.1} parent=1 // pred_check
      _
    $region7: #{tpu_custom_call.1} parent=1 // pred_check_branch
      %11 = sbr.rel (0) target = $region9
    $region8: #{tpu_custom_call.1} parent=1 // pred_region
      _
    $region9: #{tpu_custom_call.1} parent=1 // pred_fallthru
      _
    %v12 = vld [vmem:[%s0] sm:$0xff]
    %v13 = vld [vmem:[%s1] sm:$0xff]
    %v14 = vlaneseq
    %v15 = vand.u32 %v14, 127
    %vm16 = vcmp.lt.s32.totalorder %v15, 32
    %v17 = vsel %vm16, %v12, -1e+30
    %18 = vmax.xlane.f32.xlu0 %v17
    %v19 = vpop.xlane.xlu0 %18
    %v20 = vsub.f32 %v12, %v19
    %v21 = vmul.f32 %v20, 1.442695
    %v22 = vpow.pop %v21
    %v23 = vsel %vm16, %v22, 0.0
    %24 = vadd.xlane.f32.xlu0 %v23
    %v25 = vpop.xlane.xlu0 %24
    %v26 = vlog2.pop %v25
    %v27 = vmul.f32 %v26, 0.6931472
    %v28 = vsel %vm16, %v20, 0.0
    %29 = vadd.xlane.f32.xlu0 %v28
    %v30 = vpop.xlane.xlu0 %29
    %31 = vset.pattern.permute.xlu0 0
    %32 = vperm.xlu0 %31, %v13
    %v33 = vpop.permute.xlu0 %32
    %vm34 = vcmp.eq.s32.totalorder %v15, %v33
    %v35 = vsel %vm34, %v20, 0.0
    %36 = vadd.xlane.f32.xlu0 %v35
    %v37 = vpop.xlane.xlu0 %36
    %v38 = vmul.f32 %v37, 0.999999
    %v39 = vsub.f32 %v27, %v38
    %v40 = vmul.f32 %v30, 3.125e-08
    %v41 = vsub.f32 %v39, %v40
    %s42 = smul.u32 0, 8
    %v43 = vlaneseq
    %v44 = vshrl.u32 %v43, 7
    %v45 = vstv %s42
    %v46 = vadd.s32 %v45, %v44
    %vm47 = vcmp.lt.s32.totalorder %v46, 8
    %v48 = vsel %vm47, 1, 0
    %v49 = vcvt.s32.f32 %v48
    %v50 = vmul.f32 %v41, %v49
    %vm51 = vcmask 7168
    %v52 = vsel %vm51, %v50, 0.0
    %53 = vadd.xlane.f32.xlu0 %v52
    %v54 = vpop.xlane.xlu0 %53
    %v55 = vrot.slane %v54, 4
    %v56 = vadd.f32 %v54, %v55
    %v57 = vrot.slane %v56, 2
    %v58 = vadd.f32 %v56, %v57
    %v59 = vrot.slane %v58, 1
    %v60 = vadd.f32 %v58, %v59
    %s61 = vtos %v60
    %v62 = vstv %s61
    %v63 = vadd.f32 %v62, 0.0
    %64 = vst [vmem:[#allocation2] sm:$0xff] %v63
    // Predicated region
    $region10: #{tpu_custom_call.1} parent=1 // pred_check
      _
    $region11: #{tpu_custom_call.1} parent=1 // pred_check_branch
      %66 = sbr.rel (0) target = $region13
    $region12: #{tpu_custom_call.1} parent=1 // pred_region
      %s68 = ssub.s32 128, 128
      %69 = vsyncadd [#allocation3], %s68
      %s71 = sshll.u32 [#allocation2], 4
      %s72 = int_to_ptr.vmem [resolvable:$true] %s71
      %74 = dma.vmem_to_hbm [thread:$0]  %s72, 128, %s2, [#allocation3]
    $region13: #{tpu_custom_call.1} parent=1 // pred_fallthru
      _
    // Predicated region
    $region14: #{tpu_custom_call.1} parent=1 // pred_check
      _
    $region15: #{tpu_custom_call.1} parent=1 // pred_check_branch
      %76 = sbr.rel (0) target = $region17
    $region16: #{tpu_custom_call.1} parent=1 // pred_region
      %77 = dma.done [#allocation3], 128
    $region17: #{tpu_custom_call.1} parent=1 // pred_fallthru
      _
    %78 = vsyncpa [#allocation3], 1

</llo_original>
